<compile_context>
chip_gen: v7x
topology: tpu7x:2x2x1
jax: 0.10.0
libtpu: 0.0.40
codegen_flags: <defaults>
</compile_context>

<pallas_src>
import jax
import jax.numpy as jnp
from jax.experimental import pallas as pl
from jax.experimental.pallas import tpu as pltpu


_LANE = 128
# Rows per native sublane group, by element size (sub-32-bit dtypes pack).
_SUBLANE = {1: 32, 2: 16, 4: 8, 8: 8}


def _cdiv(a: int, b: int) -> int:
    return -(-a // b)


def _round_up(x: int, m: int) -> int:
    return _cdiv(x, m) * m


def _add_bias_kernel(b_ref, x_ref, o_ref):
    # b_ref: (rb, 1) per-row bias; x_ref / o_ref: (rb, cb) tiles.
    # Single broadcast VPU add -> kernel stays purely DMA / HBM-bound.
    o_ref[...] = x_ref[...] + b_ref[...]


def _tpu_generation_params():
    """(target_tile_bytes, vmem_limit_cap_bytes) for the current TPU generation."""
    is_v7x = False
    try:
        kind = jax.devices()[0].device_kind.lower()
        is_v7x = ("v7" in kind) or ("7x" in kind)
    except Exception:
        pass
    if not is_v7x:
        try:  # fall back on VMEM capacity: v7x has 64 MiB/TC vs 128 MiB on v5e/v6e
            info = pltpu.get_tpu_info()
            is_v7x = getattr(info, "vmem_capacity_bytes", 128 << 20) <= (64 << 20)
        except Exception:
            pass
    if is_v7x:
        # Faster HBM -> bigger tiles to amortize the ~0.35 us/step overhead,
        # but cap the scoped-VMEM limit well under the 64 MiB physical VMEM.
        return 8 << 20, 40 << 20
    # v5e / v6e: 4 MiB tiles already measure ~86% of the HBM roofline.
    return 4 << 20, 100 << 20


def _pick_tile(rows: int, cols: int, itemsize: int,
               target_bytes: int, min_steps: int = 2):
    """Pick a (rb, cb) VMEM tile of roughly `target_bytes`.

    rb is a dtype-aware sublane multiple (or the full row extent when rows are
    fewer than one sublane group); cb is a 128-lane multiple (or the full
    column extent).  Neither needs to divide rows/cols -- ragged last blocks
    are masked by Pallas.  When possible the grid is forced to >= `min_steps`
    steps so a "parallel" axis can shard across v7x's two TensorCores.
    """
    sub = _SUBLANE.get(itemsize, 8)
    row_bytes = max(cols * itemsize, 1)

    # --- row block -----------------------------------------------------------
    if rows > sub:
        rb = (target_bytes // row_bytes) // sub * sub          # byte budget
        rb = min(max(rb, sub), (rows // sub) * sub)            # <= rows, >= sub
        if min_steps > 1:                                      # >= 2 grid steps
            rb = min(rb, max(_round_up(_cdiv(rows, min_steps), sub), sub))
    else:
        rb = rows                                              # full extent: legal

    # --- column block (only when row tiling alone can't stay under budget,
    #     e.g. tiny N*C with huge H*W, or can't give >= 2 steps) --------------
    tile_bytes = rb * row_bytes
    if cols > _LANE and (
            tile_bytes > target_bytes
            or (rows <= sub and min_steps > 1 and tile_bytes > (1 << 20))):
        cb = (target_bytes // max(rb * itemsize, 1)) // _LANE * _LANE
        cb = min(max(cb, _LANE), (cols // _LANE) * _LANE)
        if rows <= sub and min_steps > 1:
            cb = min(cb, max(_round_up(_cdiv(cols, min_steps), _LANE), _LANE))
    else:
        cb = cols                                              # full extent: legal
    return rb, cb


def add_bias(x: jax.Array, bias: jax.Array) -> jax.Array:
    """x: (N, C, H, W), bias: (C,) -> (N, C, H, W); out = x + bias broadcast over C."""
    N, C, H, W = x.shape
    assert bias.shape == (C,)
    HW = H * W
    R = N * C
    itemsize = jnp.dtype(x.dtype).itemsize

    # Lane-dense layout: flatten spatial dims onto the lane axis, batch*channel
    # onto the sublane axis.  (If H*W is not a multiple of 128 the output store
    # is masked -- see header note.)
    x2 = x.reshape(R, HW)
    # Per-flattened-row bias (row r = n*C + c -> bias[c]), in x's dtype so the
    # in-kernel add does not promote.  N*C*itemsize bytes of side traffic,
    # negligible next to the 2*N*C*H*W bytes the kernel must move anyway.
    b2 = jnp.broadcast_to(bias.astype(x.dtype)[None, :], (N, C)).reshape(R, 1)

    target_bytes, vmem_cap = _tpu_generation_params()
    rb, cb = _pick_tile(R, HW, itemsize, target_bytes, min_steps=2)
    grid = (_cdiv(R, rb), _cdiv(HW, cb))

    # VMEM actually needed: double-buffered x + out tiles plus the (tiny,
    # double-buffered) bias column, plus slack for compiler-internal scratch.
    tile_bytes = rb * cb * itemsize
    vmem_limit = min(max(2 * 2 * tile_bytes + 2 * rb * itemsize + (2 << 20),
                         16 << 20),
                     vmem_cap)

    out2 = pl.pallas_call(
        _add_bias_kernel,
        out_shape=jax.ShapeDtypeStruct((R, HW), x.dtype),
        grid=grid,
        in_specs=[
            pl.BlockSpec((rb, 1), lambda i, j: (i, 0)),    # bias rows (constant over j)
            pl.BlockSpec((rb, cb), lambda i, j: (i, j)),   # x tile, lane-dense
        ],
        out_specs=pl.BlockSpec((rb, cb), lambda i, j: (i, j)),
        compiler_params=pltpu.CompilerParams(
            dimension_semantics=("parallel", "parallel"),  # shards across TCs on v7x
            vmem_limit_bytes=vmem_limit,
        ),
    )(b2, x2)

    return out2.reshape(N, C, H, W)


if __name__ == "__main__":
    key = jax.random.PRNGKey(0)
    kx, kb = jax.random.split(key)

    # Small shapes consistent with the module's forward (4-D NCHW input, bias over C).
    N, C, H, W = 2, 4, 16, 16
    x = jax.random.normal(kx, (N, C, H, W), dtype=jnp.float32)
    bias = jax.random.normal(kb, (C,), dtype=jnp.float32)  # deterministic "parameter"

    out = add_bias(x, bias)
    out = jax.block_until_ready(out)

    # Reference check against plain-JAX broadcast add (the module's math).
    ref = x + bias[None, :, None, None]
    assert out.shape == x.shape and out.dtype == x.dtype
    assert jnp.max(jnp.abs(out - ref)) < 1e-6

    print("KERNEL_OK")
</pallas_src>

<mosaic_0001>
module attributes {stable_mosaic.version = 11 : i64} {
  func.func @_add_bias_kernel(%arg0: i32, %arg1: i32, %arg2: memref<8x1xf32, #tpu.memory_space<vmem>>, %arg3: memref<8x256xf32, #tpu.memory_space<vmem>>, %arg4: memref<8x256xf32, #tpu.memory_space<vmem>>) attributes {dimension_semantics = [#tpu.dimension_semantics<parallel>, #tpu.dimension_semantics<parallel>], iteration_bounds = array<i64: 1, 1>, scalar_prefetch = 0 : i64, scratch_operands = 0 : i64, tpu.core_type = #tpu.core_type<tc>, window_params = [{transform_indices = @transform_0, window_bounds = array<i64: 8, 1>}, {transform_indices = @transform_1, window_bounds = array<i64: 8, 256>}, {transform_indices = @transform_2, window_bounds = array<i64: 8, 256>}]} {
    %c0 = arith.constant 0 : index
    %c0_0 = arith.constant 0 : index
    %0 = vector.load %arg3[%c0, %c0_0] : memref<8x256xf32, #tpu.memory_space<vmem>>, vector<8x256xf32>
    %c0_1 = arith.constant 0 : index
    %c0_2 = arith.constant 0 : index
    %1 = vector.load %arg2[%c0_1, %c0_2] : memref<8x1xf32, #tpu.memory_space<vmem>>, vector<8x1xf32>
    %2 = vector.broadcast %1 : vector<8x1xf32> to vector<8x256xf32>
    %3 = arith.addf %0, %2 : vector<8x256xf32>
    %c0_3 = arith.constant 0 : index
    %c0_4 = arith.constant 0 : index
    %4 = vector.load %arg4[%c0_3, %c0_4] : memref<8x256xf32, #tpu.memory_space<vmem>>, vector<8x256xf32>
    tpu.vector_store %arg4[%c0_3, %c0_4], %3 {strides = array<i32>} : memref<8x256xf32, #tpu.memory_space<vmem>>, vector<8x256xf32>,
    return
  }
  func.func @transform_0(%arg0: i32, %arg1: i32) -> (i32, i32) {
    %c0_i32 = arith.constant 0 : i32
    %c0_i32_0 = arith.constant 0 : i32
    return %arg0, %c0_i32 : i32, i32
  }
  func.func @transform_1(%arg0: i32, %arg1: i32) -> (i32, i32) {
    %c0_i32 = arith.constant 0 : i32
    return %arg0, %arg1 : i32, i32
  }
  func.func @transform_2(%arg0: i32, %arg1: i32) -> (i32, i32) {
    %c0_i32 = arith.constant 0 : i32
    return %arg0, %arg1 : i32, i32
  }
}

</mosaic_0001>

<llo_original>
// kernel: tpu_custom_call.1
$region0: #{tpu_custom_call.1}
  #allocation0 [shape = 'u32[]', space=smem, size = 0x4, offset = 0x4, fixed_abs, tag = 'smem constant byte address 0x4 - core index']
  #allocation1 [shape = 'u32[144,128]{1,0:T(1,128)}', space=vmem, size = 0x12000, scoped, tag = 'internal scratch']
  %s0 = inlined_call_operand.vmem [shape: f32[8,1], index: 0, kind: input, shape index: {}]
  %s1 = inlined_call_operand.hbm [shape: f32[8,256], index: 1, kind: input, shape index: {}]
  %s2 = inlined_call_operand.hbm [shape: f32[8,256], index: 2, kind: output, shape index: {}]
  %s3 = sld [smem:[#allocation0]]
  $region22: #{tpu_custom_call.1} parent=0
    _
  %s5 = ssub.s32 1, %s3
  %s6 = scalar_select 0, %s5, %s3
  $region1: #{tpu_custom_call.1} parent=0
    #allocation2 [shape = 'u8[8192]{0}', space=vmem, size = 0x2000, scoped, tag = 'input window, operand 1, single buffered']
    #allocation3 [shape = 's32[1]{0}', space=sflag, size = 0x4, scoped, tag = 'scoped memory for tpu_custom_call.1']
    #allocation4 [shape = 's32[1]{0}', space=sflag, size = 0x4, scoped, tag = 'scoped memory for tpu_custom_call.1']
    #allocation5 [shape = 'u8[8192]{0}', space=vmem, size = 0x2000, scoped, tag = 'output window, operand 0, single buffered']
    %7 = vsyncpa [#allocation3], 0
    %8 = vsyncpa [#allocation4], 0
    // Predicated region
    $region2: #{tpu_custom_call.1} parent=1 // pred_check
      _
    $region3: #{tpu_custom_call.1} parent=1 // pred_check_branch
      %10 = sbr.rel (0) target = $region5
    $region4: #{tpu_custom_call.1} parent=1 // pred_region
      _
    $region5: #{tpu_custom_call.1} parent=1 // pred_fallthru
      _
    // Predicated region
    $region6: #{tpu_custom_call.1} parent=1 // pred_check
      _
    $region7: #{tpu_custom_call.1} parent=1 // pred_check_branch
      %12 = sbr.rel (0) target = $region9
    $region8: #{tpu_custom_call.1} parent=1 // pred_region
      %s14 = ssub.s32 256, 256
      %15 = vsyncadd [#allocation3], %s14
      %s17 = sshll.u32 [#allocation2], 4
      %s18 = int_to_ptr.vmem [resolvable:$true] %s17
      %20 = dma.hbm_to_vmem [thread:$0]  %s1, 256, %s18, [#allocation3]
    $region9: #{tpu_custom_call.1} parent=1 // pred_fallthru
      _
    // Predicated region
    $region10: #{tpu_custom_call.1} parent=1 // pred_check
      _
    $region11: #{tpu_custom_call.1} parent=1 // pred_check_branch
      %22 = sbr.rel (0) target = $region13
    $region12: #{tpu_custom_call.1} parent=1 // pred_region
      %23 = dma.done [#allocation3], 256
    $region13: #{tpu_custom_call.1} parent=1 // pred_fallthru
      _
    %v24 = vld [vmem:[#allocation2] sm:$0xff]
    %v25 = vld [vmem:[#allocation2 + $0x8] sm:$0xff]
    %v26 = vld [vmem:[%s0] sm:$0xff]
    %28 = vset.pattern.permute.xlu0 0
    %29 = vperm.xlu0 %28, %v26
    %v30 = vpop.permute.xlu0 %29
    %v32 = vadd.f32 %v24, %v30
    %v33 = vadd.f32 %v25, %v30
    %34 = vst [vmem:[#allocation5] sm:$0xff] %v32
    %35 = vst [vmem:[#allocation5 + $0x8] sm:$0xff] %v33
    // Predicated region
    $region14: #{tpu_custom_call.1} parent=1 // pred_check
      _
    $region15: #{tpu_custom_call.1} parent=1 // pred_check_branch
      %37 = sbr.rel (0) target = $region17
    $region16: #{tpu_custom_call.1} parent=1 // pred_region
      %s39 = ssub.s32 256, 256
      %40 = vsyncadd [#allocation4], %s39
      %s42 = sshll.u32 [#allocation5], 4
      %s43 = int_to_ptr.vmem [resolvable:$true] %s42
      %45 = dma.vmem_to_hbm [thread:$0]  %s43, 256, %s2, [#allocation4]
    $region17: #{tpu_custom_call.1} parent=1 // pred_fallthru
      _
    // Predicated region
    $region18: #{tpu_custom_call.1} parent=1 // pred_check
      _
    $region19: #{tpu_custom_call.1} parent=1 // pred_check_branch
      %47 = sbr.rel (0) target = $region21
    $region20: #{tpu_custom_call.1} parent=1 // pred_region
      %48 = dma.done [#allocation4], 256
    $region21: #{tpu_custom_call.1} parent=1 // pred_fallthru
      _
    %49 = vsyncpa [#allocation3], 1
    %50 = vsyncpa [#allocation4], 1

</llo_original>
